<compile_context>
chip_gen: v7x
topology: tpu7x:2x2x1
jax: 0.10.0
libtpu: 0.0.40
codegen_flags: <defaults>
</compile_context>

<pallas_src>
import functools

import jax
import jax.numpy as jnp
from jax.experimental import pallas as pl
from jax.experimental.pallas import tpu as pltpu


HIDDEN = 256


def _round_up(x, m):
    return ((x + m - 1) // m) * m


def _sigmoid(x, act_dtype):
    # sigmoid(x) == 0.5 * tanh(0.5 * x) + 0.5 : a single EUP transcendental per
    # element. Optionally evaluated in bf16 (v6e/v7x EUP runs bf16 ~2x faster);
    # on v5e Mosaic falls back to f32 math for the bf16 ops.
    x = x.astype(act_dtype)
    half = jnp.asarray(0.5, dtype=act_dtype)
    return jnp.tanh(x * half) * half + half


def discriminator_kernel(
    s_ref, a_ref,                # (TB, S) f32, (TB, A) f32   batch tiles (move)
    w1s_ref, w1a_ref, b1_ref,    # (S, H) f32, (A, H) f32, (1, H) f32 (resident)
    w2_ref, b2_ref,              # (H, H) compute dtype, (1, H) f32
    w3_ref, b3_ref,              # (H, H) compute dtype, (1, H) f32
    w4_ref, b4_ref,              # (1, H) f32 (VMEM), (1, 1) f32 (SMEM)
    out_ref,                     # (TB, 1) f32
    *, act_dtype,
):
    cdt = w2_ref.dtype           # MXU operand dtype for the 256x256 layers

    # Layer 1: fused cat([s, a]) @ W1 via row-split weights. K is tiny (S, A),
    # so these matmuls always run with f32 operands — cheap and exact.
    h = jnp.dot(s_ref[...], w1s_ref[...], preferred_element_type=jnp.float32)
    h = h + jnp.dot(a_ref[...], w1a_ref[...], preferred_element_type=jnp.float32)
    h = _sigmoid(h + b1_ref[...], act_dtype)

    # Layer 2 (f32 accumulation regardless of operand dtype).
    h = jnp.dot(h.astype(cdt), w2_ref[...], preferred_element_type=jnp.float32)
    h = _sigmoid(h + b2_ref[...], act_dtype)

    # Layer 3
    h = jnp.dot(h.astype(cdt), w3_ref[...], preferred_element_type=jnp.float32)
    h = _sigmoid(h + b3_ref[...], act_dtype)

    # Output layer (N = 1): VPU broadcast-multiply + XLU lane reduction instead
    # of a 1-output-column MXU matmul. Final math in f32.
    logit = jnp.sum(h.astype(jnp.float32) * w4_ref[...], axis=-1, keepdims=True)
    out_ref[...] = (logit + b4_ref[0, 0]).astype(out_ref.dtype)


def discriminator_forward(
    s, a, params, *,
    block_rows=1024,             # large tiles amortize per-grid-step overhead
    compute_dtype=jnp.float32,   # bf16 = MXU fast path (all chips)
    act_dtype=jnp.float32,       # bf16 = EUP fast path on v6e/v7x
):
    """Full MLP forward pass in one batch-tiled Pallas kernel. Returns (B, 1) f32."""
    w1s, w1a, b1, w2, b2, w3, b3, w4, b4 = params
    B = s.shape[0]
    S = w1s.shape[0]
    A = w1a.shape[0]
    H = w2.shape[0]

    use_bf16 = (jnp.dtype(compute_dtype) == jnp.dtype(jnp.bfloat16)
                or jnp.dtype(act_dtype) == jnp.dtype(jnp.bfloat16))
    align = 16 if use_bf16 else 8         # bf16 native tile is (16, 128)

    # Batch tiling: TB rows per grid step, aligned; pad batch to a multiple of
    # TB and slice afterwards. If a single step would cover the whole batch,
    # split it in two so v7x's two TensorCores both get work.
    tb = min(block_rows, _round_up(B, align))
    if (tb == _round_up(B, align) and tb >= 2 * align
            and tb % 2 == 0 and (tb // 2) % align == 0):
        tb //= 2
    b_pad = _round_up(B, tb)

    s = s.astype(jnp.float32)
    a = a.astype(jnp.float32)
    if b_pad > B:
        pad = ((0, b_pad - B), (0, 0))
        s = jnp.pad(s, pad)
        a = jnp.pad(a, pad)

    w2c = w2.astype(compute_dtype)
    w3c = w3.astype(compute_dtype)

    grid = (b_pad // tb,)
    const = lambda i: (0, 0)              # resident weights: same block each step

    w_itemsize = jnp.dtype(compute_dtype).itemsize
    flops = 2 * b_pad * ((S + A) * H + 2 * H * H + H)
    transcendentals = 3 * b_pad * H       # one tanh per hidden element per layer
    bytes_accessed = (
        (s.size + a.size) * 4
        + (w1s.size + w1a.size) * 4
        + (w2c.size + w3c.size) * w_itemsize
        + (b1.size + b2.size + b3.size + w4.size + b4.size) * 4
        + b_pad * 4
    )

    out = pl.pallas_call(
        functools.partial(discriminator_kernel, act_dtype=act_dtype),
        out_shape=jax.ShapeDtypeStruct((b_pad, 1), jnp.float32),
        grid=grid,
        in_specs=[
            pl.BlockSpec((tb, S), lambda i: (i, 0)),      # s tile (moves)
            pl.BlockSpec((tb, A), lambda i: (i, 0)),      # a tile (moves)
            pl.BlockSpec((S, H), const),                  # W1[:S]   (resident)
            pl.BlockSpec((A, H), const),                  # W1[S:]   (resident)
            pl.BlockSpec((1, H), const),                  # b1
            pl.BlockSpec((H, H), const),                  # W2
            pl.BlockSpec((1, H), const),                  # b2
            pl.BlockSpec((H, H), const),                  # W3
            pl.BlockSpec((1, H), const),                  # b3
            pl.BlockSpec((1, H), const),                  # w4 row
            pl.BlockSpec(memory_space=pltpu.MemorySpace.SMEM),   # b4 scalar
        ],
        out_specs=pl.BlockSpec((tb, 1), lambda i: (i, 0)),
        compiler_params=pltpu.CompilerParams(
            dimension_semantics=("parallel",),            # v7x: 2 TCs split batch
        ),
        cost_estimate=pl.CostEstimate(
            flops=flops,
            transcendentals=transcendentals,
            bytes_accessed=bytes_accessed,
        ),
    )(s, a, w1s, w1a, b1, w2c, b2, w3c, b3, w4, b4)

    return out[:B]


def init_params(key, state_dim, action_dim, hidden=HIDDEN):
    """PyTorch-style U(-1/sqrt(fan_in), 1/sqrt(fan_in)) init.

    Weights stored as (in_features, out_features); W1 is split row-wise into
    (state, action) halves so layer 1 fuses the concat without a padded input
    slab; the output layer is stored as a (1, hidden) row for the in-kernel
    VPU reduction."""
    def linear(k, fan_in, fan_out):
        kw, kb = jax.random.split(k)
        bound = 1.0 / jnp.sqrt(jnp.float32(fan_in))
        w = jax.random.uniform(kw, (fan_in, fan_out), jnp.float32, -bound, bound)
        b = jax.random.uniform(kb, (1, fan_out), jnp.float32, -bound, bound)
        return w, b

    k1, k2, k3, k4 = jax.random.split(key, 4)
    w1, b1 = linear(k1, state_dim + action_dim, hidden)
    w2, b2 = linear(k2, hidden, hidden)
    w3, b3 = linear(k3, hidden, hidden)
    w4, b4 = linear(k4, hidden, 1)

    w1s, w1a = w1[:state_dim], w1[state_dim:]
    return (w1s, w1a, b1, w2, b2, w3, b3, w4.T, b4)   # w4 as (1, hidden), b4 (1, 1)


def reference_forward(s, a, params):
    """Plain-JAX reference (mirrors the PyTorch module exactly)."""
    w1s, w1a, b1, w2, b2, w3, b3, w4, b4 = params
    w1 = jnp.concatenate([w1s, w1a], axis=0)
    x = jnp.concatenate([s, a], axis=-1)
    h = jax.nn.sigmoid(x @ w1 + b1)
    h = jax.nn.sigmoid(h @ w2 + b2)
    h = jax.nn.sigmoid(h @ w3 + b3)
    return h @ w4.T + b4


if __name__ == "__main__":
    # Small shapes consistent with the module: flattened obs + flattened action.
    B, STATE_DIM, ACTION_DIM = 16, 32, 8

    key = jax.random.PRNGKey(0)
    k_s, k_a, k_p = jax.random.split(key, 3)

    s = jax.random.normal(k_s, (B, STATE_DIM), jnp.float32)
    a = jax.random.normal(k_a, (B, ACTION_DIM), jnp.float32)
    params = init_params(k_p, STATE_DIM, ACTION_DIM)

    ref = reference_forward(s, a, params)

    # Exact path (f32 matmuls, f32 tanh-sigmoid): tight correctness check.
    logit = discriminator_forward(s, a, params)
    logit = jax.block_until_ready(logit)
    assert logit.shape == (B, 1)
    err = float(jnp.max(jnp.abs(logit - ref)))
    assert err < 1e-4, f"f32 path mismatch: max err {err}"

    # Fast path: bf16 MXU operands + bf16 EUP activations (v6e/v7x config);
    # loose smoke-test tolerance.
    logit_fast = discriminator_forward(
        s, a, params, compute_dtype=jnp.bfloat16, act_dtype=jnp.bfloat16)
    logit_fast = jax.block_until_ready(logit_fast)
    err_fast = float(jnp.max(jnp.abs(logit_fast - ref)))
    assert err_fast < 1e-1, f"bf16 fast path mismatch: max err {err_fast}"

    print("KERNEL_OK")
</pallas_src>

<mosaic_0001>
module attributes {stable_mosaic.version = 11 : i64} {
  func.func @discriminator_kernel(%arg0: i32, %arg1: memref<8x32xf32, #tpu.memory_space<vmem>>, %arg2: memref<8x8xf32, #tpu.memory_space<vmem>>, %arg3: memref<32x256xf32, #tpu.memory_space<vmem>>, %arg4: memref<8x256xf32, #tpu.memory_space<vmem>>, %arg5: memref<1x256xf32, #tpu.memory_space<vmem>>, %arg6: memref<256x256xf32, #tpu.memory_space<vmem>>, %arg7: memref<1x256xf32, #tpu.memory_space<vmem>>, %arg8: memref<256x256xf32, #tpu.memory_space<vmem>>, %arg9: memref<1x256xf32, #tpu.memory_space<vmem>>, %arg10: memref<1x256xf32, #tpu.memory_space<vmem>>, %arg11: memref<1x1xf32, #tpu.memory_space<smem>>, %arg12: memref<8x1xf32, #tpu.memory_space<vmem>>) attributes {dimension_semantics = [#tpu.dimension_semantics<parallel>], iteration_bounds = array<i64: 2>, scalar_prefetch = 0 : i64, scratch_operands = 0 : i64, tpu.core_type = #tpu.core_type<tc>, window_params = [{transform_indices = @transform_0, window_bounds = array<i64: 8, 32>}, {transform_indices = @transform_1, window_bounds = array<i64: 8, 8>}, {pipeline_mode = #tpu.pipeline_mode<synchronous>, transform_indices = @transform_2, window_bounds = array<i64: 32, 256>}, {pipeline_mode = #tpu.pipeline_mode<synchronous>, transform_indices = @transform_3, window_bounds = array<i64: 8, 256>}, {pipeline_mode = #tpu.pipeline_mode<synchronous>, transform_indices = @transform_4, window_bounds = array<i64: 1, 256>}, {pipeline_mode = #tpu.pipeline_mode<synchronous>, transform_indices = @transform_5, window_bounds = array<i64: 256, 256>}, {pipeline_mode = #tpu.pipeline_mode<synchronous>, transform_indices = @transform_6, window_bounds = array<i64: 1, 256>}, {pipeline_mode = #tpu.pipeline_mode<synchronous>, transform_indices = @transform_7, window_bounds = array<i64: 256, 256>}, {pipeline_mode = #tpu.pipeline_mode<synchronous>, transform_indices = @transform_8, window_bounds = array<i64: 1, 256>}, {pipeline_mode = #tpu.pipeline_mode<synchronous>, transform_indices = @transform_9, window_bounds = array<i64: 1, 256>}, {transform_indices = @transform_10, window_bounds = array<i64: 1, 1>}, {transform_indices = @transform_11, window_bounds = array<i64: 8, 1>}]} {
    %c0 = arith.constant 0 : index
    %c0_0 = arith.constant 0 : index
    %0 = vector.load %arg1[%c0, %c0_0] : memref<8x32xf32, #tpu.memory_space<vmem>>, vector<8x32xf32>
    %c0_1 = arith.constant 0 : index
    %c0_2 = arith.constant 0 : index
    %1 = vector.load %arg3[%c0_1, %c0_2] : memref<32x256xf32, #tpu.memory_space<vmem>>, vector<32x256xf32>
    %cst = arith.constant dense<0.000000e+00> : vector<8x256xf32>
    %2 = tpu.matmul %0, %1, %cst {dimension_numbers = #tpu.dot_dimension_numbers<[1], [0], [0], [1], [0, 0, 1, 1], [], []>} : vector<8x32xf32>, vector<32x256xf32>, vector<8x256xf32> -> vector<8x256xf32>
    %c0_3 = arith.constant 0 : index
    %c0_4 = arith.constant 0 : index
    %3 = vector.load %arg2[%c0_3, %c0_4] : memref<8x8xf32, #tpu.memory_space<vmem>>, vector<8x8xf32>
    %c0_5 = arith.constant 0 : index
    %c0_6 = arith.constant 0 : index
    %4 = vector.load %arg4[%c0_5, %c0_6] : memref<8x256xf32, #tpu.memory_space<vmem>>, vector<8x256xf32>
    %cst_7 = arith.constant dense<0.000000e+00> : vector<8x256xf32>
    %5 = tpu.matmul %3, %4, %cst_7 {dimension_numbers = #tpu.dot_dimension_numbers<[1], [0], [0], [1], [0, 0, 1, 1], [], []>} : vector<8x8xf32>, vector<8x256xf32>, vector<8x256xf32> -> vector<8x256xf32>
    %6 = arith.addf %2, %5 : vector<8x256xf32>
    %c0_8 = arith.constant 0 : index
    %c0_9 = arith.constant 0 : index
    %7 = vector.load %arg5[%c0_8, %c0_9] : memref<1x256xf32, #tpu.memory_space<vmem>>, vector<1x256xf32>
    %8 = vector.broadcast %7 : vector<1x256xf32> to vector<8x256xf32>
    %9 = arith.addf %6, %8 : vector<8x256xf32>
    %cst_10 = arith.constant 5.000000e-01 : f32
    %10 = vector.broadcast %cst_10 : f32 to vector<8x256xf32>
    %11 = arith.mulf %9, %10 : vector<8x256xf32>
    %12 = math.tanh %11 : vector<8x256xf32>
    %cst_11 = arith.constant 5.000000e-01 : f32
    %13 = vector.broadcast %cst_11 : f32 to vector<8x256xf32>
    %14 = arith.mulf %12, %13 : vector<8x256xf32>
    %cst_12 = arith.constant 5.000000e-01 : f32
    %15 = vector.broadcast %cst_12 : f32 to vector<8x256xf32>
    %16 = arith.addf %14, %15 : vector<8x256xf32>
    %c0_13 = arith.constant 0 : index
    %c0_14 = arith.constant 0 : index
    %17 = vector.load %arg6[%c0_13, %c0_14] : memref<256x256xf32, #tpu.memory_space<vmem>>, vector<256x256xf32>
    %cst_15 = arith.constant dense<0.000000e+00> : vector<8x256xf32>
    %18 = tpu.matmul %16, %17, %cst_15 {dimension_numbers = #tpu.dot_dimension_numbers<[1], [0], [0], [1], [0, 0, 1, 1], [], []>} : vector<8x256xf32>, vector<256x256xf32>, vector<8x256xf32> -> vector<8x256xf32>
    %c0_16 = arith.constant 0 : index
    %c0_17 = arith.constant 0 : index
    %19 = vector.load %arg7[%c0_16, %c0_17] : memref<1x256xf32, #tpu.memory_space<vmem>>, vector<1x256xf32>
    %20 = vector.broadcast %19 : vector<1x256xf32> to vector<8x256xf32>
    %21 = arith.addf %18, %20 : vector<8x256xf32>
    %cst_18 = arith.constant 5.000000e-01 : f32
    %22 = vector.broadcast %cst_18 : f32 to vector<8x256xf32>
    %23 = arith.mulf %21, %22 : vector<8x256xf32>
    %24 = math.tanh %23 : vector<8x256xf32>
    %cst_19 = arith.constant 5.000000e-01 : f32
    %25 = vector.broadcast %cst_19 : f32 to vector<8x256xf32>
    %26 = arith.mulf %24, %25 : vector<8x256xf32>
    %cst_20 = arith.constant 5.000000e-01 : f32
    %27 = vector.broadcast %cst_20 : f32 to vector<8x256xf32>
    %28 = arith.addf %26, %27 : vector<8x256xf32>
    %c0_21 = arith.constant 0 : index
    %c0_22 = arith.constant 0 : index
    %29 = vector.load %arg8[%c0_21, %c0_22] : memref<256x256xf32, #tpu.memory_space<vmem>>, vector<256x256xf32>
    %cst_23 = arith.constant dense<0.000000e+00> : vector<8x256xf32>
    %30 = tpu.matmul %28, %29, %cst_23 {dimension_numbers = #tpu.dot_dimension_numbers<[1], [0], [0], [1], [0, 0, 1, 1], [], []>} : vector<8x256xf32>, vector<256x256xf32>, vector<8x256xf32> -> vector<8x256xf32>
    %c0_24 = arith.constant 0 : index
    %c0_25 = arith.constant 0 : index
    %31 = vector.load %arg9[%c0_24, %c0_25] : memref<1x256xf32, #tpu.memory_space<vmem>>, vector<1x256xf32>
    %32 = vector.broadcast %31 : vector<1x256xf32> to vector<8x256xf32>
    %33 = arith.addf %30, %32 : vector<8x256xf32>
    %cst_26 = arith.constant 5.000000e-01 : f32
    %34 = vector.broadcast %cst_26 : f32 to vector<8x256xf32>
    %35 = arith.mulf %33, %34 : vector<8x256xf32>
    %36 = math.tanh %35 : vector<8x256xf32>
    %cst_27 = arith.constant 5.000000e-01 : f32
    %37 = vector.broadcast %cst_27 : f32 to vector<8x256xf32>
    %38 = arith.mulf %36, %37 : vector<8x256xf32>
    %cst_28 = arith.constant 5.000000e-01 : f32
    %39 = vector.broadcast %cst_28 : f32 to vector<8x256xf32>
    %40 = arith.addf %38, %39 : vector<8x256xf32>
    %c0_29 = arith.constant 0 : index
    %c0_30 = arith.constant 0 : index
    %41 = vector.load %arg10[%c0_29, %c0_30] : memref<1x256xf32, #tpu.memory_space<vmem>>, vector<1x256xf32>
    %42 = vector.broadcast %41 : vector<1x256xf32> to vector<8x256xf32>
    %43 = arith.mulf %40, %42 : vector<8x256xf32>
    %cst_31 = arith.constant dense<0.000000e+00> : vector<8xf32>
    %44 = vector.multi_reduction <add>, %43, %cst_31 [1] : vector<8x256xf32> to vector<8xf32>
    %45 = vector.shape_cast %44 : vector<8xf32> to vector<8x1xf32>
    %c0_32 = arith.constant 0 : index
    %c0_33 = arith.constant 0 : index
    %46 = memref.load %arg11[%c0_32, %c0_33] : memref<1x1xf32, #tpu.memory_space<smem>>
    %47 = vector.broadcast %46 : f32 to vector<8x1xf32>
    %48 = arith.addf %45, %47 : vector<8x1xf32>
    %c0_34 = arith.constant 0 : index
    %c0_35 = arith.constant 0 : index
    %49 = vector.load %arg12[%c0_34, %c0_35] : memref<8x1xf32, #tpu.memory_space<vmem>>, vector<8x1xf32>
    tpu.vector_store %arg12[%c0_34, %c0_35], %48 {strides = array<i32>} : memref<8x1xf32, #tpu.memory_space<vmem>>, vector<8x1xf32>,
    return
  }
  func.func @transform_0(%arg0: i32) -> (i32, i32) {
    %c0_i32 = arith.constant 0 : i32
    %c0_i32_0 = arith.constant 0 : i32
    return %arg0, %c0_i32 : i32, i32
  }
  func.func @transform_1(%arg0: i32) -> (i32, i32) {
    %c0_i32 = arith.constant 0 : i32
    %c0_i32_0 = arith.constant 0 : i32
    return %arg0, %c0_i32 : i32, i32
  }
  func.func @transform_2(%arg0: i32) -> (i32, i32) {
    %c0_i32 = arith.constant 0 : i32
    %c0_i32_0 = arith.constant 0 : i32
    %c0_i32_1 = arith.constant 0 : i32
    return %c0_i32, %c0_i32_0 : i32, i32
  }
  func.func @transform_3(%arg0: i32) -> (i32, i32) {
    %c0_i32 = arith.constant 0 : i32
    %c0_i32_0 = arith.constant 0 : i32
    %c0_i32_1 = arith.constant 0 : i32
    return %c0_i32, %c0_i32_0 : i32, i32
  }
  func.func @transform_4(%arg0: i32) -> (i32, i32) {
    %c0_i32 = arith.constant 0 : i32
    %c0_i32_0 = arith.constant 0 : i32
    %c0_i32_1 = arith.constant 0 : i32
    return %c0_i32, %c0_i32_0 : i32, i32
  }
  func.func @transform_5(%arg0: i32) -> (i32, i32) {
    %c0_i32 = arith.constant 0 : i32
    %c0_i32_0 = arith.constant 0 : i32
    %c0_i32_1 = arith.constant 0 : i32
    return %c0_i32, %c0_i32_0 : i32, i32
  }
  func.func @transform_6(%arg0: i32) -> (i32, i32) {
    %c0_i32 = arith.constant 0 : i32
    %c0_i32_0 = arith.constant 0 : i32
    %c0_i32_1 = arith.constant 0 : i32
    return %c0_i32, %c0_i32_0 : i32, i32
  }
  func.func @transform_7(%arg0: i32) -> (i32, i32) {
    %c0_i32 = arith.constant 0 : i32
    %c0_i32_0 = arith.constant 0 : i32
    %c0_i32_1 = arith.constant 0 : i32
    return %c0_i32, %c0_i32_0 : i32, i32
  }
  func.func @transform_8(%arg0: i32) -> (i32, i32) {
    %c0_i32 = arith.constant 0 : i32
    %c0_i32_0 = arith.constant 0 : i32
    %c0_i32_1 = arith.constant 0 : i32
    return %c0_i32, %c0_i32_0 : i32, i32
  }
  func.func @transform_9(%arg0: i32) -> (i32, i32) {
    %c0_i32 = arith.constant 0 : i32
    %c0_i32_0 = arith.constant 0 : i32
    %c0_i32_1 = arith.constant 0 : i32
    return %c0_i32, %c0_i32_0 : i32, i32
  }
  func.func @transform_10(%arg0: i32) -> (i32, i32) {
    %c0_i32 = arith.constant 0 : i32
    %c0_i32_0 = arith.constant 0 : i32
    %c0_i32_1 = arith.constant 0 : i32
    return %c0_i32, %c0_i32_0 : i32, i32
  }
  func.func @transform_11(%arg0: i32) -> (i32, i32) {
    %c0_i32 = arith.constant 0 : i32
    %c0_i32_0 = arith.constant 0 : i32
    return %arg0, %c0_i32 : i32, i32
  }
}

</mosaic_0001>

<llo_original>
// kernel: tpu_custom_call.1
$region0: #{tpu_custom_call.1}
  #allocation0 [shape = 'u32[]', space=smem, size = 0x4, offset = 0x4, fixed_abs, tag = 'smem constant byte address 0x4 - core index']
  #allocation1 [shape = 'u32[144,128]{1,0:T(1,128)}', space=vmem, size = 0x12000, scoped, tag = 'internal scratch']
  #allocation2 [shape = 'f32[1,1]{1,0:T(1,128)S(6)}', space=smem, size = 0x200, scoped, tag = 'scoped memory for tpu_custom_call.1']
  %s0 = inlined_call_operand.vmem [shape: f32[16,32], index: 0, kind: input, shape index: {}]
  %s1 = inlined_call_operand.vmem [shape: f32[16,8], index: 1, kind: input, shape index: {}]
  %s2 = inlined_call_operand.hbm [shape: f32[32,256], index: 2, kind: input, shape index: {}]
  %s3 = inlined_call_operand.vmem [shape: f32[8,256], index: 3, kind: input, shape index: {}]
  %s4 = inlined_call_operand.vmem [shape: f32[1,256], index: 4, kind: input, shape index: {}]
  %s5 = inlined_call_operand.hbm [shape: f32[256,256], index: 5, kind: input, shape index: {}]
  %s6 = inlined_call_operand.vmem [shape: f32[1,256], index: 6, kind: input, shape index: {}]
  %s7 = inlined_call_operand.hbm [shape: f32[256,256], index: 7, kind: input, shape index: {}]
  %s8 = inlined_call_operand.vmem [shape: f32[1,256], index: 8, kind: input, shape index: {}]
  %s9 = inlined_call_operand.vmem [shape: f32[1,256], index: 9, kind: input, shape index: {}]
  %s10 = inlined_call_operand.<no memory space> [shape: f32[1,1], index: 10, kind: input, shape index: {}]
  %s11 = inlined_call_operand.vmem [shape: f32[16,1], index: 11, kind: output, shape index: {}]
  %s12 = sld [smem:[#allocation0]]
  $region89: #{tpu_custom_call.1} parent=0
    _
  %s14 = ssub.s32 1, %s12
  %s15 = scalar_select 0, %s14, %s12
  %16 = sst [smem:[#allocation2]] %s10
  $region1: #{tpu_custom_call.1} parent=0
    #allocation3 [shape = 'u8[32768]{0}', space=vmem, size = 0x8000, scoped, tag = 'input window, operand 2, single buffered']
    #allocation4 [shape = 's32[2]{0}', space=sflag, size = 0x8, scoped, tag = 'scoped memory for tpu_custom_call.1']
    #allocation5 [shape = 'u8[262144]{0}', space=vmem, size = 0x40000, scoped, tag = 'input window, operand 5, single buffered']
    #allocation6 [shape = 's32[1]{0}', space=sflag, size = 0x4, scoped, tag = 'scoped memory for tpu_custom_call.1']
    #allocation7 [shape = 'u8[262144]{0}', space=vmem, size = 0x40000, scoped, tag = 'input window, operand 7, single buffered']
    %17 = vsyncpa [#allocation4], 0
    %18 = vsyncpa [#allocation6], 0
    loop: start=0, step=1, limit=4
    $region2: #{tpu_custom_call.1} parent=1 // loop_pre_header
      _
    $region3: #{tpu_custom_call.1} parent=1 // loop_header
      %s20 = sphi 0, %s24
      %p21 = scmp.ge.s32.totalorder %s20, 4
      %s30 = sphi 0, %s32
      %s33 = sphi 0, %s30
      %s34 = sphi 0, %s33
      %s50 = sphi 0, %s34
      %s56 = sphi 0, %s58
      %s59 = sphi 0, %s56
      %s60 = sphi 0, %s59
      %s76 = sphi 0, %s60
      %s80 = sphi 0, %s80
      %s82 = sphi 0, %s80
      %s83 = sphi 0, %s82
      %s97 = sphi 0, %s83
      %s101 = sphi 0, %s101
      %s103 = sphi 0, %s101
      %s104 = sphi 0, %s103
      %s118 = sphi 0, %s104
      %s122 = sphi 0, %s122
      %s124 = sphi 0, %s122
      %s125 = sphi 0, %s124
      %s139 = sphi 0, %s125
      %s143 = sphi 0, %s143
      %s145 = sphi 0, %s143
      %s146 = sphi 0, %s145
      %s160 = sphi 0, %s146
      %s164 = sphi 0, %s164
      %s166 = sphi 0, %s164
      %s167 = sphi 0, %s166
      %s181 = sphi 0, %s167
      %s185 = sphi 0, %s185
      %s187 = sphi 0, %s185
      %s188 = sphi 0, %s187
      %s202 = sphi 0, %s188
      %s206 = sphi 0, %s206
      %s208 = sphi 0, %s206
      %s209 = sphi 0, %s208
      %s223 = sphi 0, %s209
      %s227 = sphi 0, %s227
      %s229 = sphi 0, %s227
      %s230 = sphi 0, %s229
      %s244 = sphi 0, %s230
      %s248 = sphi 0, %s248
      %s250 = sphi 0, %s248
      %s251 = sphi 0, %s250
      %s265 = sphi 0, %s251
      %s271 = sphi 0, %s273
      %s274 = sphi 0, %s271
      %s275 = sphi 0, %s274
      %s291 = sphi 0, %s275
    $region4: #{tpu_custom_call.1} parent=1 // loop_header_branch
      %23 = sbr.rel (%p21) target = $region8
    $region5: #{tpu_custom_call.1} parent=1 // loop_body
      %s25 = ssub.s32 %s20, 1
      %s26 = ssub.s32 %s20, 2
      %s27 = sadd.s32 %s20, 1
      %s28 = ssub.s32 %s20, %s27
      %p29 = scmp.eq.s32.totalorder %s28, 0
      %s31 = sadd.s32 %s30, 1
      %s32 = scalar_select %p29, %s30, %s31
      %p35 = pneg %p29
      %p36 = scmp.eq.s32.totalorder %s20, 1
      %p37 = por %p35, %p36
      %p38 = scmp.ne.s32.totalorder %s30, %s33
      %p39 = scmp.eq.s32.totalorder %s20, 0
      %p40 = por %p38, %p39
      %p41 = scmp.ne.s32.totalorder %s30, %s33
      %p42 = scmp.eq.s32.totalorder %s25, 1
      %p43 = por %p41, %p42
      %p44 = scmp.ne.s32.totalorder %s33, %s34
      %p45 = scmp.eq.s32.totalorder %s25, 0
      %p46 = por %p44, %p45
      %p47 = scmp.ne.s32.totalorder %s33, %s34
      %p48 = scmp.eq.s32.totalorder %s26, 1
      %p49 = por %p47, %p48
      %p51 = scmp.ne.s32.totalorder %s34, %s50
      %p52 = scmp.eq.s32.totalorder %s26, 0
      %p53 = por %p51, %p52
      %s54 = ssub.s32 %s20, %s27
      %p55 = scmp.eq.s32.totalorder %s54, 0
      %s57 = sadd.s32 %s56, 1
      %s58 = scalar_select %p55, %s56, %s57
      %p61 = pneg %p55
      %p62 = scmp.eq.s32.totalorder %s20, 1
      %p63 = por %p61, %p62
      %p64 = scmp.ne.s32.totalorder %s56, %s59
      %p65 = scmp.eq.s32.totalorder %s20, 0
      %p66 = por %p64, %p65
      %p67 = scmp.ne.s32.totalorder %s56, %s59
      %p68 = scmp.eq.s32.totalorder %s25, 1
      %p69 = por %p67, %p68
      %p70 = scmp.ne.s32.totalorder %s59, %s60
      %p71 = scmp.eq.s32.totalorder %s25, 0
      %p72 = por %p70, %p71
      %p73 = scmp.ne.s32.totalorder %s59, %s60
      %p74 = scmp.eq.s32.totalorder %s26, 1
      %p75 = por %p73, %p74
      %p77 = scmp.ne.s32.totalorder %s60, %s76
      %p78 = scmp.eq.s32.totalorder %s26, 0
      %p79 = por %p77, %p78
      %s81 = sadd.s32 %s80, 1
      %p84 = scmp.eq.s32.totalorder %s20, 1
      %p85 = scmp.ne.s32.totalorder %s80, %s82
      %p86 = scmp.eq.s32.totalorder %s20, 0
      %p87 = por %p85, %p86
      %p88 = scmp.ne.s32.totalorder %s80, %s82
      %p89 = scmp.eq.s32.totalorder %s25, 1
      %p90 = por %p88, %p89
      %p91 = scmp.ne.s32.totalorder %s82, %s83
      %p92 = scmp.eq.s32.totalorder %s25, 0
      %p93 = por %p91, %p92
      %p94 = scmp.ne.s32.totalorder %s82, %s83
      %p95 = scmp.eq.s32.totalorder %s26, 1
      %p96 = por %p94, %p95
      %p98 = scmp.ne.s32.totalorder %s83, %s97
      %p99 = scmp.eq.s32.totalorder %s26, 0
      %p100 = por %p98, %p99
      %s102 = sadd.s32 %s101, 1
      %p105 = scmp.eq.s32.totalorder %s20, 1
      %p106 = scmp.ne.s32.totalorder %s101, %s103
      %p107 = scmp.eq.s32.totalorder %s20, 0
      %p108 = por %p106, %p107
      %p109 = scmp.ne.s32.totalorder %s101, %s103
      %p110 = scmp.eq.s32.totalorder %s25, 1
      %p111 = por %p109, %p110
      %p112 = scmp.ne.s32.totalorder %s103, %s104
      %p113 = scmp.eq.s32.totalorder %s25, 0
      %p114 = por %p112, %p113
      %p115 = scmp.ne.s32.totalorder %s103, %s104
      %p116 = scmp.eq.s32.totalorder %s26, 1
      %p117 = por %p115, %p116
      %p119 = scmp.ne.s32.totalorder %s104, %s118
      %p120 = scmp.eq.s32.totalorder %s26, 0
      %p121 = por %p119, %p120
      %s123 = sadd.s32 %s122, 1
      %p126 = scmp.eq.s32.totalorder %s20, 1
      %p127 = scmp.ne.s32.totalorder %s122, %s124
      %p128 = scmp.eq.s32.totalorder %s20, 0
      %p129 = por %p127, %p128
      %p130 = scmp.ne.s32.totalorder %s122, %s124
      %p131 = scmp.eq.s32.totalorder %s25, 1
      %p132 = por %p130, %p131
      %p133 = scmp.ne.s32.totalorder %s124, %s125
      %p134 = scmp.eq.s32.totalorder %s25, 0
      %p135 = por %p133, %p134
      %p136 = scmp.ne.s32.totalorder %s124, %s125
      %p137 = scmp.eq.s32.totalorder %s26, 1
      %p138 = por %p136, %p137
      %p140 = scmp.ne.s32.totalorder %s125, %s139
      %p141 = scmp.eq.s32.totalorder %s26, 0
      %p142 = por %p140, %p141
      %s144 = sadd.s32 %s143, 1
      %p147 = scmp.eq.s32.totalorder %s20, 1
      %p148 = scmp.ne.s32.totalorder %s143, %s145
      %p149 = scmp.eq.s32.totalorder %s20, 0
      %p150 = por %p148, %p149
      %p151 = scmp.ne.s32.totalorder %s143, %s145
      %p152 = scmp.eq.s32.totalorder %s25, 1
      %p153 = por %p151, %p152
      %p154 = scmp.ne.s32.totalorder %s145, %s146
      %p155 = scmp.eq.s32.totalorder %s25, 0
      %p156 = por %p154, %p155
      %p157 = scmp.ne.s32.totalorder %s145, %s146
      %p158 = scmp.eq.s32.totalorder %s26, 1
      %p159 = por %p157, %p158
      %p161 = scmp.ne.s32.totalorder %s146, %s160
      %p162 = scmp.eq.s32.totalorder %s26, 0
      %p163 = por %p161, %p162
      %s165 = sadd.s32 %s164, 1
      %p168 = scmp.eq.s32.totalorder %s20, 1
      %p169 = scmp.ne.s32.totalorder %s164, %s166
      %p170 = scmp.eq.s32.totalorder %s20, 0
      %p171 = por %p169, %p170
      %p172 = scmp.ne.s32.totalorder %s164, %s166
      %p173 = scmp.eq.s32.totalorder %s25, 1
      %p174 = por %p172, %p173
      %p175 = scmp.ne.s32.totalorder %s166, %s167
      %p176 = scmp.eq.s32.totalorder %s25, 0
      %p177 = por %p175, %p176
      %p178 = scmp.ne.s32.totalorder %s166, %s167
      %p179 = scmp.eq.s32.totalorder %s26, 1
      %p180 = por %p178, %p179
      %p182 = scmp.ne.s32.totalorder %s167, %s181
      %p183 = scmp.eq.s32.totalorder %s26, 0
      %p184 = por %p182, %p183
      %s186 = sadd.s32 %s185, 1
      %p189 = scmp.eq.s32.totalorder %s20, 1
      %p190 = scmp.ne.s32.totalorder %s185, %s187
      %p191 = scmp.eq.s32.totalorder %s20, 0
      %p192 = por %p190, %p191
      %p193 = scmp.ne.s32.totalorder %s185, %s187
      %p194 = scmp.eq.s32.totalorder %s25, 1
      %p195 = por %p193, %p194
      %p196 = scmp.ne.s32.totalorder %s187, %s188
      %p197 = scmp.eq.s32.totalorder %s25, 0
      %p198 = por %p196, %p197
      %p199 = scmp.ne.s32.totalorder %s187, %s188
      %p200 = scmp.eq.s32.totalorder %s26, 1
      %p201 = por %p199, %p200
      %p203 = scmp.ne.s32.totalorder %s188, %s202
      %p204 = scmp.eq.s32.totalorder %s26, 0
      %p205 = por %p203, %p204
      %s207 = sadd.s32 %s206, 1
      %p210 = scmp.eq.s32.totalorder %s20, 1
      %p211 = scmp.ne.s32.totalorder %s206, %s208
      %p212 = scmp.eq.s32.totalorder %s20, 0
      %p213 = por %p211, %p212
      %p214 = scmp.ne.s32.totalorder %s206, %s208
      %p215 = scmp.eq.s32.totalorder %s25, 1
      %p216 = por %p214, %p215
      %p217 = scmp.ne.s32.totalorder %s208, %s209
      %p218 = scmp.eq.s32.totalorder %s25, 0
      %p219 = por %p217, %p218
      %p220 = scmp.ne.s32.totalorder %s208, %s209
      %p221 = scmp.eq.s32.totalorder %s26, 1
      %p222 = por %p220, %p221
      %p224 = scmp.ne.s32.totalorder %s209, %s223
      %p225 = scmp.eq.s32.totalorder %s26, 0
      %p226 = por %p224, %p225
      %s228 = sadd.s32 %s227, 1
      %p231 = scmp.eq.s32.totalorder %s20, 1
      %p232 = scmp.ne.s32.totalorder %s227, %s229
      %p233 = scmp.eq.s32.totalorder %s20, 0
      %p234 = por %p232, %p233
      %p235 = scmp.ne.s32.totalorder %s227, %s229
      %p236 = scmp.eq.s32.totalorder %s25, 1
      %p237 = por %p235, %p236
      %p238 = scmp.ne.s32.totalorder %s229, %s230
      %p239 = scmp.eq.s32.totalorder %s25, 0
      %p240 = por %p238, %p239
      %p241 = scmp.ne.s32.totalorder %s229, %s230
      %p242 = scmp.eq.s32.totalorder %s26, 1
      %p243 = por %p241, %p242
      %p245 = scmp.ne.s32.totalorder %s230, %s244
      %p246 = scmp.eq.s32.totalorder %s26, 0
      %p247 = por %p245, %p246
      %s249 = sadd.s32 %s248, 1
      %p252 = scmp.eq.s32.totalorder %s20, 1
      %p253 = scmp.ne.s32.totalorder %s248, %s250
      %p254 = scmp.eq.s32.totalorder %s20, 0
      %p255 = por %p253, %p254
      %p256 = scmp.ne.s32.totalorder %s248, %s250
      %p257 = scmp.eq.s32.totalorder %s25, 1
      %p258 = por %p256, %p257
      %p259 = scmp.ne.s32.totalorder %s250, %s251
      %p260 = scmp.eq.s32.totalorder %s25, 0
      %p261 = por %p259, %p260
      %p262 = scmp.ne.s32.totalorder %s250, %s251
      %p263 = scmp.eq.s32.totalorder %s26, 1
      %p264 = por %p262, %p263
      %p266 = scmp.ne.s32.totalorder %s251, %s265
      %p267 = scmp.eq.s32.totalorder %s26, 0
      %p268 = por %p266, %p267
      %s269 = ssub.s32 %s20, %s27
      %p270 = scmp.eq.s32.totalorder %s269, 0
      %s272 = sadd.s32 %s271, 1
      %s273 = scalar_select %p270, %s271, %s272
      %p276 = pneg %p270
      %p277 = scmp.eq.s32.totalorder %s20, 1
      %p278 = por %p276, %p277
      %p279 = scmp.ne.s32.totalorder %s271, %s274
      %p280 = scmp.eq.s32.totalorder %s20, 0
      %p281 = por %p279, %p280
      %p282 = scmp.ne.s32.totalorder %s271, %s274
      %p283 = scmp.eq.s32.totalorder %s25, 1
      %p284 = por %p282, %p283
      %p285 = scmp.ne.s32.totalorder %s274, %s275
      %p286 = scmp.eq.s32.totalorder %s25, 0
      %p287 = por %p285, %p286
      %p288 = scmp.ne.s32.totalorder %s274, %s275
      %p289 = scmp.eq.s32.totalorder %s26, 1
      %p290 = por %p288, %p289
      %p292 = scmp.ne.s32.totalorder %s275, %s291
      %p293 = scmp.eq.s32.totalorder %s26, 0
      %p294 = por %p292, %p293
      %p295 = scmp.le.s32.totalorder 1, %s20
      %p296 = scmp.lt.s32.totalorder %s20, 3
      %p297 = pnand %p295, %p296
      %p298 = pneg %p297
      // Predicated region
      $region9: #{tpu_custom_call.1} parent=5 // pred_check
        _
      $region10: #{tpu_custom_call.1} parent=5 // pred_check_branch
        %300 = sbr.rel (%p297) target = $region12
      $region11: #{tpu_custom_call.1} parent=5 // pred_region
        %s301 = ssub.s32 %s20, 1
        // Predicated region
        $region13: #{tpu_custom_call.1} parent=11 // pred_check
          %p302 = pneg %p93
        $region14: #{tpu_custom_call.1} parent=11 // pred_check_branch
          %304 = sbr.rel (%p302) target = $region16
        $region15: #{tpu_custom_call.1} parent=11 // pred_region
          %s306 = ssub.s32 1024, 1024
          %307 = vsyncadd [#allocation4], %s306
          %s308 = sshll.u32 [#allocation3], 4
          %s309 = int_to_ptr.vmem [resolvable:$true] %s308
          %314 = dma.hbm_to_vmem [thread:$0]  %s2, 1024, %s309, [#allocation4], 256, 256, 16
        $region16: #{tpu_custom_call.1} parent=11 // pred_fallthru
          _
        // Predicated region
        $region17: #{tpu_custom_call.1} parent=11 // pred_check
          %p315 = pneg %p114
        $region18: #{tpu_custom_call.1} parent=11 // pred_check_branch
          %317 = sbr.rel (%p315) target = $region20
        $region19: #{tpu_custom_call.1} parent=11 // pred_region
          _
        $region20: #{tpu_custom_call.1} parent=11 // pred_fallthru
          _
        // Predicated region
        $region21: #{tpu_custom_call.1} parent=11 // pred_check
          %p318 = pneg %p135
        $region22: #{tpu_custom_call.1} parent=11 // pred_check_branch
          %320 = sbr.rel (%p318) target = $region24
        $region23: #{tpu_custom_call.1} parent=11 // pred_region
          _
        $region24: #{tpu_custom_call.1} parent=11 // pred_fallthru
          _
        // Predicated region
        $region25: #{tpu_custom_call.1} parent=11 // pred_check
          %p321 = pneg %p156
        $region26: #{tpu_custom_call.1} parent=11 // pred_check_branch
          %323 = sbr.rel (%p321) target = $region28
        $region27: #{tpu_custom_call.1} parent=11 // pred_region
          %s325 = ssub.s32 8192, 8192
          %326 = vsyncadd [#allocation6], %s325
          %s327 = sshll.u32 [#allocation5], 4
          %s328 = int_to_ptr.vmem [resolvable:$true] %s327
          %333 = dma.hbm_to_vmem [thread:$0]  %s5, 8192, %s328, [#allocation6], 256, 256, 16
        $region28: #{tpu_custom_call.1} parent=11 // pred_fallthru
          _
        // Predicated region
        $region29: #{tpu_custom_call.1} parent=11 // pred_check
          %p334 = pneg %p177
        $region30: #{tpu_custom_call.1} parent=11 // pred_check_branch
          %336 = sbr.rel (%p334) target = $region32
        $region31: #{tpu_custom_call.1} parent=11 // pred_region
          _
        $region32: #{tpu_custom_call.1} parent=11 // pred_fallthru
          _
        // Predicated region
        $region33: #{tpu_custom_call.1} parent=11 // pred_check
          %p337 = pneg %p198
        $region34: #{tpu_custom_call.1} parent=11 // pred_check_branch
          %339 = sbr.rel (%p337) target = $region36
        $region35: #{tpu_custom_call.1} parent=11 // pred_region
          %s341 = ssub.s32 8192, 8192
          %342 = vsyncadd [#allocation6], %s341
          %s343 = sshll.u32 [#allocation7], 4
          %s344 = int_to_ptr.vmem [resolvable:$true] %s343
          %349 = dma.hbm_to_vmem [thread:$0]  %s7, 8192, %s344, [#allocation6], 256, 256, 16
        $region36: #{tpu_custom_call.1} parent=11 // pred_fallthru
          _
        // Predicated region
        $region37: #{tpu_custom_call.1} parent=11 // pred_check
          %p350 = pneg %p219
        $region38: #{tpu_custom_call.1} parent=11 // pred_check_branch
          %352 = sbr.rel (%p350) target = $region40
        $region39: #{tpu_custom_call.1} parent=11 // pred_region
          _
        $region40: #{tpu_custom_call.1} parent=11 // pred_fallthru
          _
        // Predicated region
        $region41: #{tpu_custom_call.1} parent=11 // pred_check
          %p353 = pneg %p240
        $region42: #{tpu_custom_call.1} parent=11 // pred_check_branch
          %355 = sbr.rel (%p353) target = $region44
        $region43: #{tpu_custom_call.1} parent=11 // pred_region
          _
        $region44: #{tpu_custom_call.1} parent=11 // pred_fallthru
          _
        // Predicated region
        $region45: #{tpu_custom_call.1} parent=11 // pred_check
          %p356 = pneg %p261
        $region46: #{tpu_custom_call.1} parent=11 // pred_check_branch
          %358 = sbr.rel (%p356) target = $region48
        $region47: #{tpu_custom_call.1} parent=11 // pred_region
          _
        $region48: #{tpu_custom_call.1} parent=11 // pred_fallthru
          _
      $region12: #{tpu_custom_call.1} parent=5 // pred_fallthru
        _
      %p359 = scmp.lt.s32.totalorder %s20, 2
      // Predicated region
      $region49: #{tpu_custom_call.1} parent=5 // pred_check
        %p360 = pneg %p359
      $region50: #{tpu_custom_call.1} parent=5 // pred_check_branch
        %362 = sbr.rel (%p360) target = $region52
      $region51: #{tpu_custom_call.1} parent=5 // pred_region
        // Predicated region
        $region53: #{tpu_custom_call.1} parent=51 // pred_check
          %p363 = pneg %p40
        $region54: #{tpu_custom_call.1} parent=51 // pred_check_branch
          %365 = sbr.rel (%p363) target = $region56
        $region55: #{tpu_custom_call.1} parent=51 // pred_region
          %p366 = scmp.lt.s32.totalorder %s20, 1
          %s367 = scalar_select %p366, %s20, 1
          %s368 = smul.addr %s367, 8
          %s369 = scalar_lea.vmem %s0, %s368
        $region56: #{tpu_custom_call.1} parent=51 // pred_fallthru
          _
        // Predicated region
        $region57: #{tpu_custom_call.1} parent=51 // pred_check
          %p370 = pneg %p66
        $region58: #{tpu_custom_call.1} parent=51 // pred_check_branch
          %372 = sbr.rel (%p370) target = $region60
        $region59: #{tpu_custom_call.1} parent=51 // pred_region
          %p373 = scmp.lt.s32.totalorder %s20, 1
          %s374 = scalar_select %p373, %s20, 1
          %s375 = smul.addr %s374, 8
          %s376 = scalar_lea.vmem %s1, %s375
        $region60: #{tpu_custom_call.1} parent=51 // pred_fallthru
          _
      $region52: #{tpu_custom_call.1} parent=5 // pred_fallthru
        _
      %p377 = scmp.le.s32.totalorder 1, %s20
      %p378 = scmp.lt.s32.totalorder %s20, 3
      %p379 = pnand %p377, %p378
      %p380 = pneg %p379
      // Predicated region
      $region61: #{tpu_custom_call.1} parent=5 // pred_check
        _
      $region62: #{tpu_custom_call.1} parent=5 // pred_check_branch
        %382 = sbr.rel (%p379) target = $region64
      $region63: #{tpu_custom_call.1} parent=5 // pred_region
        %s383 = ssub.s32 %s20, 1
        // Predicated region
        $region65: #{tpu_custom_call.1} parent=63 // pred_check
          %p384 = pneg %p93
        $region66: #{tpu_custom_call.1} parent=63 // pred_check_branch
          %386 = sbr.rel (%p384) target = $region68
        $region67: #{tpu_custom_call.1} parent=63 // pred_region
          %387 = dma.done [#allocation4], 1024
        $region68: #{tpu_custom_call.1} parent=63 // pred_fallthru
          _
        // Predicated region
        $region69: #{tpu_custom_call.1} parent=63 // pred_check
          %p388 = pneg %p156
        $region70: #{tpu_custom_call.1} parent=63 // pred_check_branch
          %390 = sbr.rel (%p388) target = $region72
        $region71: #{tpu_custom_call.1} parent=63 // pred_region
          %391 = dma.done [#allocation6], 8192
        $region72: #{tpu_custom_call.1} parent=63 // pred_fallthru
          _
        // Predicated region
        $region73: #{tpu_custom_call.1} parent=63 // pred_check
          %p392 = pneg %p198
        $region74: #{tpu_custom_call.1} parent=63 // pred_check_branch
          %394 = sbr.rel (%p392) target = $region76
        $region75: #{tpu_custom_call.1} parent=63 // pred_region
          %395 = dma.done [#allocation6], 8192
        $region76: #{tpu_custom_call.1} parent=63 // pred_fallthru
          _
        %p396 = scmp.lt.s32.totalorder %s25, 1
        %s397 = scalar_select %p396, %s25, 1
        %s398 = smul.addr %s397, 8
        %s399 = scalar_lea.vmem %s0, %s398
        %p400 = pneg %p46
        %p401 = pneg %p43
        %p402 = scmp.lt.s32.totalorder %s25, 1
        %s403 = scalar_select %p402, %s25, 1
        %s404 = smul.addr %s403, 8
        %s405 = scalar_lea.vmem %s1, %s404
        %p406 = pneg %p72
        %p407 = pneg %p69
        %p408 = pneg %p93
        %p409 = pneg %p90
        %p410 = pneg %p114
        %p411 = pneg %p111
        %p412 = pneg %p135
        %p413 = pneg %p132
        %p414 = pneg %p156
        %p415 = pneg %p153
        %p416 = pneg %p177
        %p417 = pneg %p174
        %p418 = pneg %p198
        %p419 = pneg %p195
        %p420 = pneg %p219
        %p421 = pneg %p216
        %p422 = pneg %p240
        %p423 = pneg %p237
        %p424 = pneg %p261
        %p425 = pneg %p258
        %p426 = pneg %p287
        %p427 = pneg %p284
        %p428 = scmp.lt.s32.totalorder %s25, 1
        %s429 = scalar_select %p428, %s25, 1
        %s430 = smul.addr %s429, 8
        %s431 = scalar_lea.vmem %s11, %s430
        %p432 = scmp.lt.s32.totalorder %s25, 1
        %s433 = scalar_select %p432, %s25, 1
        %s434 = smul.addr %s433, 8
        %s435 = scalar_lea.vmem %s0, %s434
        %p436 = scmp.lt.s32.totalorder %s25, 1
        %s437 = scalar_select %p436, %s25, 1
        %s438 = smul.addr %s437, 8
        %s439 = scalar_lea.vmem %s1, %s438
        %p440 = scmp.lt.s32.totalorder %s25, 1
        %s441 = scalar_select %p440, %s25, 1
        %s442 = smul.addr %s441, 8
        %s443 = scalar_lea.vmem %s11, %s442
        %v444 = vld [vmem:[%s435] sm:$0xff]
        %v445 = vld [vmem:[#allocation3] sm:$0xff]
        %v446 = vld [vmem:[#allocation3 + $0x8] sm:$0xff]
        %v447 = vld [vmem:[#allocation3 + $0x10] sm:$0xff]
        %v448 = vld [vmem:[#allocation3 + $0x18] sm:$0xff]
        %v449 = vld [vmem:[#allocation3 + $0x20] sm:$0xff]
        %v450 = vld [vmem:[#allocation3 + $0x28] sm:$0xff]
        %v451 = vld [vmem:[#allocation3 + $0x30] sm:$0xff]
        %v452 = vld [vmem:[#allocation3 + $0x38] sm:$0xff]
        %v453 = vld [vmem:[%s439] sm:$0xff]
        %v454 = vld [vmem:[%s3] sm:$0xff]
        %v455 = vld [vmem:[%s3 + $0x8] sm:$0xff]
        %vm456 = vcmask 64512
        %v458 = vsel %vm456, %v453, 0
        %460 = vmatprep.subr.mxu0 %v455
        %461 = vmatpush1.msra.mxu0 %v454
        %462 = vmatprep.subr.mxu0 0.0
        %463 = vmatpush1.msra.mxu0 0.0
        %464 = vmatprep.subr.mxu0 0.0
        %465 = vmatpush1.msra.mxu0 0.0
        %466 = vmatprep.subr.mxu0 0.0
        %467 = vmatpush1.msra.mxu0 0.0
        %468 = vmatprep.subr.mxu0 0.0
        %469 = vmatpush1.msra.mxu0 0.0
        %470 = vmatprep.subr.mxu0 0.0
        %471 = vmatpush1.msra.mxu0 0.0
        %472 = vmatprep.subr.mxu0 0.0
        %473 = vmatpush1.msra.mxu0 0.0
        %474 = vmatprep.subr.mxu0 0.0
        %475 = vmatpush1.msra.mxu0 0.0
        %476 = vmatprep.subr.mxu0 0.0
        %477 = vmatpush1.msra.mxu0 0.0
        %478 = vmatprep.subr.mxu0 0.0
        %479 = vmatpush1.msra.mxu0 0.0
        %480 = vmatprep.subr.mxu0 0.0
        %481 = vmatpush1.msra.mxu0 0.0
        %482 = vmatprep.subr.mxu0 0.0
        %483 = vmatpush1.msra.mxu0 0.0
        %484 = vmatprep.subr.mxu0 0.0
        %485 = vmatpush1.msra.mxu0 0.0
        %486 = vmatprep.subr.mxu0 0.0
        %487 = vmatpush1.msra.mxu0 0.0
        %488 = vmatprep.subr.mxu0 0.0
        %489 = vmatpush1.msra.mxu0 0.0
        %490 = vmatprep.subr.mxu0 0.0
        %491 = vmatpush1.msra.mxu0 0.0
        %492 = vmatprep.subr.mxu0 0.0
        %493 = vmatpush1.msra.mxu0 0.0
        %494 = vmatprep.subr.mxu0 0.0
        %495 = vmatpush1.msra.mxu0 0.0
        %496 = vmatprep.subr.mxu0 0.0
        %497 = vmatpush1.msra.mxu0 0.0
        %498 = vmatprep.subr.mxu0 0.0
        %499 = vmatpush1.msra.mxu0 0.0
        %500 = vmatprep.subr.mxu0 0.0
        %501 = vmatpush1.msra.mxu0 0.0
        %502 = vmatprep.subr.mxu0 0.0
        %503 = vmatpush1.msra.mxu0 0.0
        %504 = vmatprep.subr.mxu0 0.0
        %505 = vmatpush1.msra.mxu0 0.0
        %506 = vmatprep.subr.mxu0 0.0
        %507 = vmatpush1.msra.mxu0 0.0
        %508 = vmatprep.subr.mxu0 0.0
        %509 = vmatpush1.msra.mxu0 0.0
        %510 = vmatprep.subr.mxu0 0.0
        %511 = vmatpush1.msra.mxu0 0.0
        %512 = vmatprep.subr.mxu0 0.0
        %513 = vmatpush1.msra.mxu0 0.0
        %514 = vmatprep.subr.mxu0 0.0
        %515 = vmatpush1.msra.mxu0 0.0
        %516 = vmatprep.subr.mxu0 0.0
        %517 = vmatpush1.msra.mxu0 0.0
        %518 = vmatprep.subr.mxu0 0.0
        %519 = vmatpush1.msra.mxu0 0.0
        %520 = vmatprep.subr.mxu0 0.0
        %521 = vmatpush1.msra.mxu0 0.0
        %522 = vmatprep.subr.mxu0 0.0
        %523 = vmatpush1.msra.mxu0 0.0
        %524 = vmatprep.mubr.f32.mxu0 0.0
        %525 = vmatmul.mubr.f32.gmra.mrb[0].mxu0 %v458
        %v526 = vpop.f32.mrb[0].mxu0
        %v527 = vadd.f32 0.0, %v526
        %v528 = vpop.f32.mrb[0].mxu0
        %v529 = vadd.f32 0.0, %v528
        %530 = vdwg.mxu0
        %vm531 = vcmask 261120
        %v533 = vsel %vm531, %v444, 0
        %535 = vmatprep.subr.mxu0 %v446
        %536 = vmatpush1.msra.mxu0 %v445
        %537 = vmatprep.subr.mxu0 %v448
        %538 = vmatpush1.msra.mxu0 %v447
        %539 = vmatprep.subr.mxu0 %v450
        %540 = vmatpush1.msra.mxu0 %v449
        %541 = vmatprep.subr.mxu0 %v452
        %542 = vmatpush1.msra.mxu0 %v451
        %543 = vmatprep.subr.mxu0 0.0
        %544 = vmatpush1.msra.mxu0 0.0
        %545 = vmatprep.subr.mxu0 0.0
        %546 = vmatpush1.msra.mxu0 0.0
        %547 = vmatprep.subr.mxu0 0.0
        %548 = vmatpush1.msra.mxu0 0.0
        %549 = vmatprep.subr.mxu0 0.0
        %550 = vmatpush1.msra.mxu0 0.0
        %551 = vmatprep.subr.mxu0 0.0
        %552 = vmatpush1.msra.mxu0 0.0
        %553 = vmatprep.subr.mxu0 0.0
        %554 = vmatpush1.msra.mxu0 0.0
        %555 = vmatprep.subr.mxu0 0.0
        %556 = vmatpush1.msra.mxu0 0.0
        %557 = vmatprep.subr.mxu0 0.0
        %558 = vmatpush1.msra.mxu0 0.0
        %559 = vmatprep.subr.mxu0 0.0
        %560 = vmatpush1.msra.mxu0 0.0
        %561 = vmatprep.subr.mxu0 0.0
        %562 = vmatpush1.msra.mxu0 0.0
        %563 = vmatprep.subr.mxu0 0.0
        %564 = vmatpush1.msra.mxu0 0.0
        %565 = vmatprep.subr.mxu0 0.0
        %566 = vmatpush1.msra.mxu0 0.0
        %567 = vmatprep.subr.mxu0 0.0
        %568 = vmatpush1.msra.mxu0 0.0
        %569 = vmatprep.subr.mxu0 0.0
        %570 = vmatpush1.msra.mxu0 0.0
        %571 = vmatprep.subr.mxu0 0.0
        %572 = vmatpush1.msra.mxu0 0.0
        %573 = vmatprep.subr.mxu0 0.0
        %574 = vmatpush1.msra.mxu0 0.0
        %575 = vmatprep.subr.mxu0 0.0
        %576 = vmatpush1.msra.mxu0 0.0
        %577 = vmatprep.subr.mxu0 0.0
        %578 = vmatpush1.msra.mxu0 0.0
        %579 = vmatprep.subr.mxu0 0.0
        %580 = vmatpush1.msra.mxu0 0.0
        %581 = vmatprep.subr.mxu0 0.0
        %582 = vmatpush1.msra.mxu0 0.0
        %583 = vmatprep.subr.mxu0 0.0
        %584 = vmatpush1.msra.mxu0 0.0
        %585 = vmatprep.subr.mxu0 0.0
        %586 = vmatpush1.msra.mxu0 0.0
        %587 = vmatprep.subr.mxu0 0.0
        %588 = vmatpush1.msra.mxu0 0.0
        %589 = vmatprep.subr.mxu0 0.0
        %590 = vmatpush1.msra.mxu0 0.0
        %591 = vmatprep.subr.mxu0 0.0
        %592 = vmatpush1.msra.mxu0 0.0
        %593 = vmatprep.subr.mxu0 0.0
        %594 = vmatpush1.msra.mxu0 0.0
        %595 = vmatprep.subr.mxu0 0.0
        %596 = vmatpush1.msra.mxu0 0.0
        %597 = vmatprep.subr.mxu0 0.0
        %598 = vmatpush1.msra.mxu0 0.0
        %599 = vmatprep.mubr.f32.mxu0 0.0
        %600 = vmatmul.mubr.f32.gmra.mrb[0].mxu0 %v533
        %v601 = vpop.f32.mrb[0].mxu0
        %v602 = vadd.f32 %v527, %v601
        %v603 = vpop.f32.mrb[0].mxu0
        %v604 = vadd.f32 %v529, %v603
        %605 = vdwg.mxu0
        %v606 = vld [vmem:[%s4] sm:$0x3]
        %v608 = vlaneseq
        %v609 = vshrl.u32 %v608, 7
        %v610 = vsub.s32 0, %v609
        %v611 = vrot.slane %v606, %v610
        %v612 = vlaneseq
        %v613 = vshrl.u32 %v612, 7
        %v614 = vsub.s32 1, %v613
        %v615 = vrot.slane %v606, %v614
        %v618 = vadd.f32 %v602, %v611
        %v619 = vadd.f32 %v604, %v615
        %v620 = vmul.f32 %v618, 0.5
        %v621 = vmul.f32 %v619, 0.5
        %v622 = vtanh.pop %v620
        %v623 = vtanh.pop %v621
        %v624 = vmul.f32 %v622, 0.5
        %v625 = vmul.f32 %v623, 0.5
        %v626 = vadd.f32 %v624, 0.5
        %v627 = vadd.f32 %v625, 0.5
        %v628 = vld [vmem:[#allocation5] sm:$0xff]
        %v629 = vld [vmem:[#allocation5 + $0x8] sm:$0xff]
        %v630 = vld [vmem:[#allocation5 + $0x10] sm:$0xff]
        %v631 = vld [vmem:[#allocation5 + $0x18] sm:$0xff]
        %v632 = vld [vmem:[#allocation5 + $0x20] sm:$0xff]
        %v633 = vld [vmem:[#allocation5 + $0x28] sm:$0xff]
        %v634 = vld [vmem:[#allocation5 + $0x30] sm:$0xff]
        %v635 = vld [vmem:[#allocation5 + $0x38] sm:$0xff]
        %v636 = vld [vmem:[#allocation5 + $0x40] sm:$0xff]
        %v637 = vld [vmem:[#allocation5 + $0x48] sm:$0xff]
        %v638 = vld [vmem:[#allocation5 + $0x50] sm:$0xff]
        %v639 = vld [vmem:[#allocation5 + $0x58] sm:$0xff]
        %v640 = vld [vmem:[#allocation5 + $0x60] sm:$0xff]
        %v641 = vld [vmem:[#allocation5 + $0x68] sm:$0xff]
        %v642 = vld [vmem:[#allocation5 + $0x70] sm:$0xff]
        %v643 = vld [vmem:[#allocation5 + $0x78] sm:$0xff]
        %v644 = vld [vmem:[#allocation5 + $0x80] sm:$0xff]
        %v645 = vld [vmem:[#allocation5 + $0x88] sm:$0xff]
        %v646 = vld [vmem:[#allocation5 + $0x90] sm:$0xff]
        %v647 = vld [vmem:[#allocation5 + $0x98] sm:$0xff]
        %v648 = vld [vmem:[#allocation5 + $0xa0] sm:$0xff]
        %v649 = vld [vmem:[#allocation5 + $0xa8] sm:$0xff]
        %v650 = vld [vmem:[#allocation5 + $0xb0] sm:$0xff]
        %v651 = vld [vmem:[#allocation5 + $0xb8] sm:$0xff]
        %v652 = vld [vmem:[#allocation5 + $0xc0] sm:$0xff]
        %v653 = vld [vmem:[#allocation5 + $0xc8] sm:$0xff]
        %v654 = vld [vmem:[#allocation5 + $0xd0] sm:$0xff]
        %v655 = vld [vmem:[#allocation5 + $0xd8] sm:$0xff]
        %v656 = vld [vmem:[#allocation5 + $0xe0] sm:$0xff]
        %v657 = vld [vmem:[#allocation5 + $0xe8] sm:$0xff]
        %v658 = vld [vmem:[#allocation5 + $0xf0] sm:$0xff]
        %v659 = vld [vmem:[#allocation5 + $0xf8] sm:$0xff]
        %v660 = vld [vmem:[#allocation5 + $0x100] sm:$0xff]
        %v661 = vld [vmem:[#allocation5 + $0x108] sm:$0xff]
        %v662 = vld [vmem:[#allocation5 + $0x110] sm:$0xff]
        %v663 = vld [vmem:[#allocation5 + $0x118] sm:$0xff]
        %v664 = vld [vmem:[#allocation5 + $0x120] sm:$0xff]
        %v665 = vld [vmem:[#allocation5 + $0x128] sm:$0xff]
        %v666 = vld [vmem:[#allocation5 + $0x130] sm:$0xff]
        %v667 = vld [vmem:[#allocation5 + $0x138] sm:$0xff]
        %v668 = vld [vmem:[#allocation5 + $0x140] sm:$0xff]
        %v669 = vld [vmem:[#allocation5 + $0x148] sm:$0xff]
        %v670 = vld [vmem:[#allocation5 + $0x150] sm:$0xff]
        %v671 = vld [vmem:[#allocation5 + $0x158] sm:$0xff]
        %v672 = vld [vmem:[#allocation5 + $0x160] sm:$0xff]
        %v673 = vld [vmem:[#allocation5 + $0x168] sm:$0xff]
        %v674 = vld [vmem:[#allocation5 + $0x170] sm:$0xff]
        %v675 = vld [vmem:[#allocation5 + $0x178] sm:$0xff]
        %v676 = vld [vmem:[#allocation5 + $0x180] sm:$0xff]
        %v677 = vld [vmem:[#allocation5 + $0x188] sm:$0xff]
        %v678 = vld [vmem:[#allocation5 + $0x190] sm:$0xff]
        %v679 = vld [vmem:[#allocation5 + $0x198] sm:$0xff]
        %v680 = vld [vmem:[#allocation5 + $0x1a0] sm:$0xff]
        %v681 = vld [vmem:[#allocation5 + $0x1a8] sm:$0xff]
        %v682 = vld [vmem:[#allocation5 + $0x1b0] sm:$0xff]
        %v683 = vld [vmem:[#allocation5 + $0x1b8] sm:$0xff]
        %v684 = vld [vmem:[#allocation5 + $0x1c0] sm:$0xff]
        %v685 = vld [vmem:[#allocation5 + $0x1c8] sm:$0xff]
        %v686 = vld [vmem:[#allocation5 + $0x1d0] sm:$0xff]
        %v687 = vld [vmem:[#allocation5 + $0x1d8] sm:$0xff]
        %v688 = vld [vmem:[#allocation5 + $0x1e0] sm:$0xff]
        %v689 = vld [vmem:[#allocation5 + $0x1e8] sm:$0xff]
        %v690 = vld [vmem:[#allocation5 + $0x1f0] sm:$0xff]
        %v691 = vld [vmem:[#allocation5 + $0x1f8] sm:$0xff]
        %v692 = vld [vmem:[%s6] sm:$0x3]
        %v694 = vlaneseq
        %v695 = vshrl.u32 %v694, 7
        %v696 = vsub.s32 0, %v695
        %v697 = vrot.slane %v692, %v696
        %v698 = vlaneseq
        %v699 = vshrl.u32 %v698, 7
        %v700 = vsub.s32 1, %v699
        %v701 = vrot.slane %v692, %v700
        %704 = vmatprep.subr.mxu0 %v629
        %705 = vmatpush1.msra.mxu0 %v628
        %706 = vmatprep.subr.mxu0 %v631
        %707 = vmatpush1.msra.mxu0 %v630
        %708 = vmatprep.subr.mxu0 %v633
        %709 = vmatpush1.msra.mxu0 %v632
        %710 = vmatprep.subr.mxu0 %v635
        %711 = vmatpush1.msra.mxu0 %v634
        %712 = vmatprep.subr.mxu0 %v637
        %713 = vmatpush1.msra.mxu0 %v636
        %714 = vmatprep.subr.mxu0 %v639
        %715 = vmatpush1.msra.mxu0 %v638
        %716 = vmatprep.subr.mxu0 %v641
        %717 = vmatpush1.msra.mxu0 %v640
        %718 = vmatprep.subr.mxu0 %v643
        %719 = vmatpush1.msra.mxu0 %v642
        %720 = vmatprep.subr.mxu0 %v645
        %721 = vmatpush1.msra.mxu0 %v644
        %722 = vmatprep.subr.mxu0 %v647
        %723 = vmatpush1.msra.mxu0 %v646
        %724 = vmatprep.subr.mxu0 %v649
        %725 = vmatpush1.msra.mxu0 %v648
        %726 = vmatprep.subr.mxu0 %v651
        %727 = vmatpush1.msra.mxu0 %v650
        %728 = vmatprep.subr.mxu0 %v653
        %729 = vmatpush1.msra.mxu0 %v652
        %730 = vmatprep.subr.mxu0 %v655
        %731 = vmatpush1.msra.mxu0 %v654
        %732 = vmatprep.subr.mxu0 %v657
        %733 = vmatpush1.msra.mxu0 %v656
        %734 = vmatprep.subr.mxu0 %v659
        %735 = vmatpush1.msra.mxu0 %v658
        %736 = vmatprep.subr.mxu0 %v661
        %737 = vmatpush1.msra.mxu0 %v660
        %738 = vmatprep.subr.mxu0 %v663
        %739 = vmatpush1.msra.mxu0 %v662
        %740 = vmatprep.subr.mxu0 %v665
        %741 = vmatpush1.msra.mxu0 %v664
        %742 = vmatprep.subr.mxu0 %v667
        %743 = vmatpush1.msra.mxu0 %v666
        %744 = vmatprep.subr.mxu0 %v669
        %745 = vmatpush1.msra.mxu0 %v668
        %746 = vmatprep.subr.mxu0 %v671
        %747 = vmatpush1.msra.mxu0 %v670
        %748 = vmatprep.subr.mxu0 %v673
        %749 = vmatpush1.msra.mxu0 %v672
        %750 = vmatprep.subr.mxu0 %v675
        %751 = vmatpush1.msra.mxu0 %v674
        %752 = vmatprep.subr.mxu0 %v677
        %753 = vmatpush1.msra.mxu0 %v676
        %754 = vmatprep.subr.mxu0 %v679
        %755 = vmatpush1.msra.mxu0 %v678
        %756 = vmatprep.subr.mxu0 %v681
        %757 = vmatpush1.msra.mxu0 %v680
        %758 = vmatprep.subr.mxu0 %v683
        %759 = vmatpush1.msra.mxu0 %v682
        %760 = vmatprep.subr.mxu0 %v685
        %761 = vmatpush1.msra.mxu0 %v684
        %762 = vmatprep.subr.mxu0 %v687
        %763 = vmatpush1.msra.mxu0 %v686
        %764 = vmatprep.subr.mxu0 %v689
        %765 = vmatpush1.msra.mxu0 %v688
        %766 = vmatprep.subr.mxu0 %v691
        %767 = vmatpush1.msra.mxu0 %v690
        %768 = vmatprep.mubr.f32.mxu0 %v627
        %769 = vmatmul.mubr.f32.gmra.mrb[0].mxu0 %v626
        %v770 = vpop.f32.mrb[0].mxu0
        %v771 = vadd.f32 %v697, %v770
        %v772 = vpop.f32.mrb[0].mxu0
        %v773 = vadd.f32 %v701, %v772
        %774 = vdwg.mxu0
        %v775 = vmul.f32 %v771, 0.5
        %v776 = vmul.f32 %v773, 0.5
        %v777 = vtanh.pop %v775
        %v778 = vtanh.pop %v776
        %v779 = vmul.f32 %v777, 0.5
        %v780 = vmul.f32 %v778, 0.5
        %v781 = vadd.f32 %v779, 0.5
        %v782 = vadd.f32 %v780, 0.5
        %v783 = vld [vmem:[#allocation7] sm:$0xff]
        %v784 = vld [vmem:[#allocation7 + $0x8] sm:$0xff]
        %v785 = vld [vmem:[#allocation7 + $0x10] sm:$0xff]
        %v786 = vld [vmem:[#allocation7 + $0x18] sm:$0xff]
        %v787 = vld [vmem:[#allocation7 + $0x20] sm:$0xff]
        %v788 = vld [vmem:[#allocation7 + $0x28] sm:$0xff]
        %v789 = vld [vmem:[#allocation7 + $0x30] sm:$0xff]
        %v790 = vld [vmem:[#allocation7 + $0x38] sm:$0xff]
        %v791 = vld [vmem:[#allocation7 + $0x40] sm:$0xff]
        %v792 = vld [vmem:[#allocation7 + $0x48] sm:$0xff]
        %v793 = vld [vmem:[#allocation7 + $0x50] sm:$0xff]
        %v794 = vld [vmem:[#allocation7 + $0x58] sm:$0xff]
        %v795 = vld [vmem:[#allocation7 + $0x60] sm:$0xff]
        %v796 = vld [vmem:[#allocation7 + $0x68] sm:$0xff]
        %v797 = vld [vmem:[#allocation7 + $0x70] sm:$0xff]
        %v798 = vld [vmem:[#allocation7 + $0x78] sm:$0xff]
        %v799 = vld [vmem:[#allocation7 + $0x80] sm:$0xff]
        %v800 = vld [vmem:[#allocation7 + $0x88] sm:$0xff]
        %v801 = vld [vmem:[#allocation7 + $0x90] sm:$0xff]
        %v802 = vld [vmem:[#allocation7 + $0x98] sm:$0xff]
        %v803 = vld [vmem:[#allocation7 + $0xa0] sm:$0xff]
        %v804 = vld [vmem:[#allocation7 + $0xa8] sm:$0xff]
        %v805 = vld [vmem:[#allocation7 + $0xb0] sm:$0xff]
        %v806 = vld [vmem:[#allocation7 + $0xb8] sm:$0xff]
        %v807 = vld [vmem:[#allocation7 + $0xc0] sm:$0xff]
        %v808 = vld [vmem:[#allocation7 + $0xc8] sm:$0xff]
        %v809 = vld [vmem:[#allocation7 + $0xd0] sm:$0xff]
        %v810 = vld [vmem:[#allocation7 + $0xd8] sm:$0xff]
        %v811 = vld [vmem:[#allocation7 + $0xe0] sm:$0xff]
        %v812 = vld [vmem:[#allocation7 + $0xe8] sm:$0xff]
        %v813 = vld [vmem:[#allocation7 + $0xf0] sm:$0xff]
        %v814 = vld [vmem:[#allocation7 + $0xf8] sm:$0xff]
        %v815 = vld [vmem:[#allocation7 + $0x100] sm:$0xff]
        %v816 = vld [vmem:[#allocation7 + $0x108] sm:$0xff]
        %v817 = vld [vmem:[#allocation7 + $0x110] sm:$0xff]
        %v818 = vld [vmem:[#allocation7 + $0x118] sm:$0xff]
        %v819 = vld [vmem:[#allocation7 + $0x120] sm:$0xff]
        %v820 = vld [vmem:[#allocation7 + $0x128] sm:$0xff]
        %v821 = vld [vmem:[#allocation7 + $0x130] sm:$0xff]
        %v822 = vld [vmem:[#allocation7 + $0x138] sm:$0xff]
        %v823 = vld [vmem:[#allocation7 + $0x140] sm:$0xff]
        %v824 = vld [vmem:[#allocation7 + $0x148] sm:$0xff]
        %v825 = vld [vmem:[#allocation7 + $0x150] sm:$0xff]
        %v826 = vld [vmem:[#allocation7 + $0x158] sm:$0xff]
        %v827 = vld [vmem:[#allocation7 + $0x160] sm:$0xff]
        %v828 = vld [vmem:[#allocation7 + $0x168] sm:$0xff]
        %v829 = vld [vmem:[#allocation7 + $0x170] sm:$0xff]
        %v830 = vld [vmem:[#allocation7 + $0x178] sm:$0xff]
        %v831 = vld [vmem:[#allocation7 + $0x180] sm:$0xff]
        %v832 = vld [vmem:[#allocation7 + $0x188] sm:$0xff]
        %v833 = vld [vmem:[#allocation7 + $0x190] sm:$0xff]
        %v834 = vld [vmem:[#allocation7 + $0x198] sm:$0xff]
        %v835 = vld [vmem:[#allocation7 + $0x1a0] sm:$0xff]
        %v836 = vld [vmem:[#allocation7 + $0x1a8] sm:$0xff]
        %v837 = vld [vmem:[#allocation7 + $0x1b0] sm:$0xff]
        %v838 = vld [vmem:[#allocation7 + $0x1b8] sm:$0xff]
        %v839 = vld [vmem:[#allocation7 + $0x1c0] sm:$0xff]
        %v840 = vld [vmem:[#allocation7 + $0x1c8] sm:$0xff]
        %v841 = vld [vmem:[#allocation7 + $0x1d0] sm:$0xff]
        %v842 = vld [vmem:[#allocation7 + $0x1d8] sm:$0xff]
        %v843 = vld [vmem:[#allocation7 + $0x1e0] sm:$0xff]
        %v844 = vld [vmem:[#allocation7 + $0x1e8] sm:$0xff]
        %v845 = vld [vmem:[#allocation7 + $0x1f0] sm:$0xff]
        %v846 = vld [vmem:[#allocation7 + $0x1f8] sm:$0xff]
        %v847 = vld [vmem:[%s8] sm:$0x3]
        %v849 = vlaneseq
        %v850 = vshrl.u32 %v849, 7
        %v851 = vsub.s32 0, %v850
        %v852 = vrot.slane %v847, %v851
        %v853 = vlaneseq
        %v854 = vshrl.u32 %v853, 7
        %v855 = vsub.s32 1, %v854
        %v856 = vrot.slane %v847, %v855
        %859 = vmatprep.subr.mxu0 %v784
        %860 = vmatpush1.msra.mxu0 %v783
        %861 = vmatprep.subr.mxu0 %v786
        %862 = vmatpush1.msra.mxu0 %v785
        %863 = vmatprep.subr.mxu0 %v788
        %864 = vmatpush1.msra.mxu0 %v787
        %865 = vmatprep.subr.mxu0 %v790
        %866 = vmatpush1.msra.mxu0 %v789
        %867 = vmatprep.subr.mxu0 %v792
        %868 = vmatpush1.msra.mxu0 %v791
        %869 = vmatprep.subr.mxu0 %v794
        %870 = vmatpush1.msra.mxu0 %v793
        %871 = vmatprep.subr.mxu0 %v796
        %872 = vmatpush1.msra.mxu0 %v795
        %873 = vmatprep.subr.mxu0 %v798
        %874 = vmatpush1.msra.mxu0 %v797
        %875 = vmatprep.subr.mxu0 %v800
        %876 = vmatpush1.msra.mxu0 %v799
        %877 = vmatprep.subr.mxu0 %v802
        %878 = vmatpush1.msra.mxu0 %v801
        %879 = vmatprep.subr.mxu0 %v804
        %880 = vmatpush1.msra.mxu0 %v803
        %881 = vmatprep.subr.mxu0 %v806
        %882 = vmatpush1.msra.mxu0 %v805
        %883 = vmatprep.subr.mxu0 %v808
        %884 = vmatpush1.msra.mxu0 %v807
        %885 = vmatprep.subr.mxu0 %v810
        %886 = vmatpush1.msra.mxu0 %v809
        %887 = vmatprep.subr.mxu0 %v812
        %888 = vmatpush1.msra.mxu0 %v811
        %889 = vmatprep.subr.mxu0 %v814
        %890 = vmatpush1.msra.mxu0 %v813
        %891 = vmatprep.subr.mxu0 %v816
        %892 = vmatpush1.msra.mxu0 %v815
        %893 = vmatprep.subr.mxu0 %v818
        %894 = vmatpush1.msra.mxu0 %v817
        %895 = vmatprep.subr.mxu0 %v820
        %896 = vmatpush1.msra.mxu0 %v819
        %897 = vmatprep.subr.mxu0 %v822
        %898 = vmatpush1.msra.mxu0 %v821
        %899 = vmatprep.subr.mxu0 %v824
        %900 = vmatpush1.msra.mxu0 %v823
        %901 = vmatprep.subr.mxu0 %v826
        %902 = vmatpush1.msra.mxu0 %v825
        %903 = vmatprep.subr.mxu0 %v828
        %904 = vmatpush1.msra.mxu0 %v827
        %905 = vmatprep.subr.mxu0 %v830
        %906 = vmatpush1.msra.mxu0 %v829
        %907 = vmatprep.subr.mxu0 %v832
        %908 = vmatpush1.msra.mxu0 %v831
        %909 = vmatprep.subr.mxu0 %v834
        %910 = vmatpush1.msra.mxu0 %v833
        %911 = vmatprep.subr.mxu0 %v836
        %912 = vmatpush1.msra.mxu0 %v835
        %913 = vmatprep.subr.mxu0 %v838
        %914 = vmatpush1.msra.mxu0 %v837
        %915 = vmatprep.subr.mxu0 %v840
        %916 = vmatpush1.msra.mxu0 %v839
        %917 = vmatprep.subr.mxu0 %v842
        %918 = vmatpush1.msra.mxu0 %v841
        %919 = vmatprep.subr.mxu0 %v844
        %920 = vmatpush1.msra.mxu0 %v843
        %921 = vmatprep.subr.mxu0 %v846
        %922 = vmatpush1.msra.mxu0 %v845
        %923 = vmatprep.mubr.f32.mxu0 %v782
        %924 = vmatmul.mubr.f32.gmra.mrb[0].mxu0 %v781
        %v925 = vpop.f32.mrb[0].mxu0
        %v926 = vadd.f32 %v852, %v925
        %v927 = vpop.f32.mrb[0].mxu0
        %v928 = vadd.f32 %v856, %v927
        %929 = vdwg.mxu0
        %v930 = vmul.f32 %v926, 0.5
        %v931 = vmul.f32 %v928, 0.5
        %v932 = vtanh.pop %v930
        %v933 = vtanh.pop %v931
        %v934 = vmul.f32 %v932, 0.5
        %v935 = vmul.f32 %v933, 0.5
        %v936 = vadd.f32 %v934, 0.5
        %v937 = vadd.f32 %v935, 0.5
        %v938 = vld [vmem:[%s9] sm:$0x3]
        %v940 = vlaneseq
        %v941 = vshrl.u32 %v940, 7
        %v942 = vsub.s32 0, %v941
        %v943 = vrot.slane %v938, %v942
        %v944 = vlaneseq
        %v945 = vshrl.u32 %v944, 7
        %v946 = vsub.s32 1, %v945
        %v947 = vrot.slane %v938, %v946
        %v950 = vmul.f32 %v936, %v943
        %v951 = vmul.f32 %v937, %v947
        %v952 = vadd.f32 %v950, %v951
        %953 = vadd.xlane.f32.xlu0 %v952
        %v954 = vpop.xlane.xlu0 %953
        %s955 = sld [smem:[#allocation2]]
        %v956 = vstv %s955
        %v957 = vadd.f32 %v954, %v956
        %vm958 = vcmask 7168
        %959 = vst.msk [vmem:[%s443] sm:$0xff] %vm958, %v957
        %p960 = scmp.lt.s32.totalorder %s25, 1
        %s961 = scalar_select %p960, %s25, 1
        %s962 = smul.addr %s961, 8
        %s963 = scalar_lea.vmem %s11, %s962
        // Predicated region
        $region77: #{tpu_custom_call.1} parent=63 // pred_check
          %p964 = pneg %p284
        $region78: #{tpu_custom_call.1} parent=63 // pred_check_branch
          %966 = sbr.rel (%p964) target = $region80
        $region79: #{tpu_custom_call.1} parent=63 // pred_region
          _
        $region80: #{tpu_custom_call.1} parent=63 // pred_fallthru
          _
      $region64: #{tpu_custom_call.1} parent=5 // pred_fallthru
        _
      %p967 = scmp.le.s32.totalorder 2, %s20
      // Predicated region
      $region81: #{tpu_custom_call.1} parent=5 // pred_check
        %p968 = pneg %p967
      $region82: #{tpu_custom_call.1} parent=5 // pred_check_branch
        %970 = sbr.rel (%p968) target = $region84
      $region83: #{tpu_custom_call.1} parent=5 // pred_region
        %s971 = ssub.s32 %s20, 2
        // Predicated region
        $region85: #{tpu_custom_call.1} parent=83 // pred_check
          %p972 = pneg %p290
        $region86: #{tpu_custom_call.1} parent=83 // pred_check_branch
          %974 = sbr.rel (%p972) target = $region88
        $region87: #{tpu_custom_call.1} parent=83 // pred_region
          %p975 = scmp.lt.s32.totalorder %s26, 1
          %s976 = scalar_select %p975, %s26, 1
          %s977 = smul.addr %s976, 8
          %s978 = scalar_lea.vmem %s11, %s977
        $region88: #{tpu_custom_call.1} parent=83 // pred_fallthru
          _
      $region84: #{tpu_custom_call.1} parent=5 // pred_fallthru
        _
    $region6: #{tpu_custom_call.1} parent=1 // loop_footer
      %s24 = sadd.s32 1, %s20
    $region7: #{tpu_custom_call.1} parent=1 // loop_footer_branch
      %19 = sbr.rel target = $region3
    $region8: #{tpu_custom_call.1} parent=1 // loop_exit
      _
    %979 = vsyncpa [#allocation4], 1
    %s980 = scalar_lea.sflag [#allocation4], 1
    %981 = vsyncpa %s980, 1
    %982 = vsyncpa [#allocation6], 1

</llo_original>
